<compile_context>
chip_gen: v5e
topology: v5e:2x2
jax: 0.10.0
libtpu: 0.0.40
codegen_flags: <defaults>
</compile_context>

<pallas_src>
import jax
import jax.numpy as jnp
from jax.experimental import pallas as pl
from jax.experimental.pallas import tpu as pltpu

# ---------------- config (small, consistent with the module) ----------------
BATCH = 2
SEQ = 8
N_EMBD = 32
HIDDEN = 4 * N_EMBD
GELU_C = 0.7978845608028654  # sqrt(2/pi), tanh-approx GELU


def _gelu_tanh(x):
    return 0.5 * x * (1.0 + jnp.tanh(GELU_C * (x + 0.044715 * x * x * x)))


# ----------------------------- Pallas kernel --------------------------------
def mlp_kernel(x_ref, wfc_ref, bfc_ref, wpr_ref, bpr_ref, o_ref):
    x = x_ref[...]                                                     # (B*T, C)
    h = jnp.dot(x, wfc_ref[...],
                preferred_element_type=jnp.float32) + bfc_ref[...]    # (B*T, 4C)
    h = _gelu_tanh(h)
    y = jnp.dot(h, wpr_ref[...],
                preferred_element_type=jnp.float32) + bpr_ref[...]    # (B*T, C)
    o_ref[...] = y.astype(o_ref.dtype)                                # single full-block store


# ------------------------------ wrapper --------------------------------------
@jax.jit
def mlp_forward(x, params):
    B, T, C = x.shape
    x2d = x.reshape(B * T, C)          # fold batch+seq into the matmul M dim
    vmem = pl.BlockSpec(memory_space=pltpu.MemorySpace.VMEM)
    out2d = pl.pallas_call(
        mlp_kernel,
        out_shape=jax.ShapeDtypeStruct((B * T, C), x.dtype),
        in_specs=[vmem, vmem, vmem, vmem, vmem],
        out_specs=vmem,
    )(x2d, *params)
    return out2d.reshape(B, T, C)


# --------------------------- pure-JAX reference ------------------------------
def mlp_reference(x, params):
    wfc, bfc, wpr, bpr = params
    h = _gelu_tanh(x @ wfc + bfc)
    return h @ wpr + bpr


# ------------------------------- main -----------------------------------------
if __name__ == "__main__":
    key = jax.random.PRNGKey(0)
    ks = jax.random.split(key, 5)
    C = N_EMBD

    x = jax.random.normal(ks[0], (BATCH, SEQ, C), dtype=jnp.float32)

    # nn.Linear weights pre-transposed to (in, out); GPT-style N(0, 0.02) init,
    # non-zero biases to exercise the broadcast-add path.
    params = (
        0.02 * jax.random.normal(ks[1], (C, HIDDEN), jnp.float32),   # c_fc W   (in, out)
        0.01 * jax.random.normal(ks[2], (1, HIDDEN), jnp.float32),   # c_fc b
        0.02 * jax.random.normal(ks[3], (HIDDEN, C), jnp.float32),   # c_proj W (in, out)
        0.01 * jax.random.normal(ks[4], (1, C), jnp.float32),        # c_proj b
    )

    out = mlp_forward(x, params)
    out = jax.block_until_ready(out)

    ref = mlp_reference(x, params)
    assert out.shape == (BATCH, SEQ, C)
    assert jnp.allclose(out, ref, atol=1e-4, rtol=1e-4), "mismatch vs reference"

    print("KERNEL_OK")
</pallas_src>

<mosaic_0001>
module attributes {stable_mosaic.version = 11 : i64} {
  func.func @mlp_kernel(%arg0: memref<16x32xf32, #tpu.memory_space<vmem>>, %arg1: memref<32x128xf32, #tpu.memory_space<vmem>>, %arg2: memref<1x128xf32, #tpu.memory_space<vmem>>, %arg3: memref<128x32xf32, #tpu.memory_space<vmem>>, %arg4: memref<1x32xf32, #tpu.memory_space<vmem>>, %arg5: memref<16x32xf32, #tpu.memory_space<vmem>>) attributes {dimension_semantics = [], scalar_prefetch = 0 : i64, scratch_operands = 0 : i64, tpu.core_type = #tpu.core_type<tc>} {
    %c0 = arith.constant 0 : index
    %c0_0 = arith.constant 0 : index
    %0 = vector.load %arg0[%c0, %c0_0] : memref<16x32xf32, #tpu.memory_space<vmem>>, vector<16x32xf32>
    %c0_1 = arith.constant 0 : index
    %c0_2 = arith.constant 0 : index
    %1 = vector.load %arg1[%c0_1, %c0_2] : memref<32x128xf32, #tpu.memory_space<vmem>>, vector<32x128xf32>
    %cst = arith.constant dense<0.000000e+00> : vector<16x128xf32>
    %2 = tpu.matmul %0, %1, %cst {dimension_numbers = #tpu.dot_dimension_numbers<[1], [0], [0], [1], [0, 0, 1, 1], [], []>} : vector<16x32xf32>, vector<32x128xf32>, vector<16x128xf32> -> vector<16x128xf32>
    %c0_3 = arith.constant 0 : index
    %c0_4 = arith.constant 0 : index
    %3 = vector.load %arg2[%c0_3, %c0_4] : memref<1x128xf32, #tpu.memory_space<vmem>>, vector<1x128xf32>
    %4 = vector.broadcast %3 : vector<1x128xf32> to vector<16x128xf32>
    %5 = arith.addf %2, %4 : vector<16x128xf32>
    %cst_5 = arith.constant 5.000000e-01 : f32
    %6 = vector.broadcast %cst_5 : f32 to vector<16x128xf32>
    %7 = arith.mulf %6, %5 : vector<16x128xf32>
    %cst_6 = arith.constant 4.471500e-02 : f32
    %8 = vector.broadcast %cst_6 : f32 to vector<16x128xf32>
    %9 = arith.mulf %8, %5 : vector<16x128xf32>
    %10 = arith.mulf %9, %5 : vector<16x128xf32>
    %11 = arith.mulf %10, %5 : vector<16x128xf32>
    %12 = arith.addf %5, %11 : vector<16x128xf32>
    %cst_7 = arith.constant 0.797884583 : f32
    %13 = vector.broadcast %cst_7 : f32 to vector<16x128xf32>
    %14 = arith.mulf %13, %12 : vector<16x128xf32>
    %15 = math.tanh %14 : vector<16x128xf32>
    %cst_8 = arith.constant 1.000000e+00 : f32
    %16 = vector.broadcast %cst_8 : f32 to vector<16x128xf32>
    %17 = arith.addf %16, %15 : vector<16x128xf32>
    %18 = arith.mulf %7, %17 : vector<16x128xf32>
    %c0_9 = arith.constant 0 : index
    %c0_10 = arith.constant 0 : index
    %19 = vector.load %arg3[%c0_9, %c0_10] : memref<128x32xf32, #tpu.memory_space<vmem>>, vector<128x32xf32>
    %cst_11 = arith.constant dense<0.000000e+00> : vector<16x32xf32>
    %20 = tpu.matmul %18, %19, %cst_11 {dimension_numbers = #tpu.dot_dimension_numbers<[1], [0], [0], [1], [0, 0, 1, 1], [], []>} : vector<16x128xf32>, vector<128x32xf32>, vector<16x32xf32> -> vector<16x32xf32>
    %c0_12 = arith.constant 0 : index
    %c0_13 = arith.constant 0 : index
    %21 = vector.load %arg4[%c0_12, %c0_13] : memref<1x32xf32, #tpu.memory_space<vmem>>, vector<1x32xf32>
    %22 = vector.broadcast %21 : vector<1x32xf32> to vector<16x32xf32>
    %23 = arith.addf %20, %22 : vector<16x32xf32>
    %c0_14 = arith.constant 0 : index
    %c0_15 = arith.constant 0 : index
    %24 = vector.load %arg5[%c0_14, %c0_15] : memref<16x32xf32, #tpu.memory_space<vmem>>, vector<16x32xf32>
    tpu.vector_store %arg5[%c0_14, %c0_15], %23 {strides = array<i32>} : memref<16x32xf32, #tpu.memory_space<vmem>>, vector<16x32xf32>,
    return
  }
}

</mosaic_0001>

<llo_original>
// kernel: mlp_forward.1
$region0: #{mlp_forward.1}
  #allocation0 [shape = 'u32[]', space=smem, size = 0x4, offset = 0x4, fixed_abs, tag = 'smem constant byte address 0x4 - core index']
  #allocation1 [shape = 'u32[72,128]{1,0:T(1,128)}', space=vmem, size = 0x9000, scoped, tag = 'internal scratch']
  %s0 = inlined_call_operand.vmem [shape: f32[16,32], index: 0, kind: input, shape index: {}]
  %s1 = inlined_call_operand.vmem [shape: f32[32,128], index: 1, kind: input, shape index: {}]
  %s2 = inlined_call_operand.vmem [shape: f32[1,128], index: 2, kind: input, shape index: {}]
  %s3 = inlined_call_operand.vmem [shape: f32[128,32], index: 3, kind: input, shape index: {}]
  %s4 = inlined_call_operand.vmem [shape: f32[1,32], index: 4, kind: input, shape index: {}]
  %s5 = inlined_call_operand.hbm [shape: f32[16,32], index: 5, kind: output, shape index: {}]
  %s6 = sld [smem:[#allocation0]]
  $region30: #{mlp_forward.1} parent=0
    _
  %s8 = ssub.s32 1, %s6
  %s9 = scalar_select 0, %s8, %s6
  $region1: #{mlp_forward.1} parent=0
    #allocation2 [shape = 'u8[8192]{0}', space=vmem, size = 0x2000, scoped, tag = 'output window, operand 0, single buffered']
    #allocation3 [shape = 's32[1]{0}', space=sflag, size = 0x4, scoped, tag = 'scoped memory for mlp_forward.1']
    %10 = vsyncpa [#allocation3], 0
    // Predicated region
    $region2: #{mlp_forward.1} parent=1 // pred_check
      _
    $region3: #{mlp_forward.1} parent=1 // pred_check_branch
      %12 = sbr.rel (0) target = $region5
    $region4: #{mlp_forward.1} parent=1 // pred_region
      _
    $region5: #{mlp_forward.1} parent=1 // pred_fallthru
      _
    // Predicated region
    $region6: #{mlp_forward.1} parent=1 // pred_check
      _
    $region7: #{mlp_forward.1} parent=1 // pred_check_branch
      %14 = sbr.rel (0) target = $region9
    $region8: #{mlp_forward.1} parent=1 // pred_region
      _
    $region9: #{mlp_forward.1} parent=1 // pred_fallthru
      _
    // Predicated region
    $region10: #{mlp_forward.1} parent=1 // pred_check
      _
    $region11: #{mlp_forward.1} parent=1 // pred_check_branch
      %16 = sbr.rel (0) target = $region13
    $region12: #{mlp_forward.1} parent=1 // pred_region
      _
    $region13: #{mlp_forward.1} parent=1 // pred_fallthru
      _
    // Predicated region
    $region14: #{mlp_forward.1} parent=1 // pred_check
      _
    $region15: #{mlp_forward.1} parent=1 // pred_check_branch
      %18 = sbr.rel (0) target = $region17
    $region16: #{mlp_forward.1} parent=1 // pred_region
      _
    $region17: #{mlp_forward.1} parent=1 // pred_fallthru
      _
    // Predicated region
    $region18: #{mlp_forward.1} parent=1 // pred_check
      _
    $region19: #{mlp_forward.1} parent=1 // pred_check_branch
      %20 = sbr.rel (0) target = $region21
    $region20: #{mlp_forward.1} parent=1 // pred_region
      _
    $region21: #{mlp_forward.1} parent=1 // pred_fallthru
      _
    %v21 = vld [vmem:[%s0] sm:$0xff]
    %v22 = vld [vmem:[%s0 + $0x8] sm:$0xff]
    %v23 = vld [vmem:[%s1] sm:$0xff]
    %v24 = vld [vmem:[%s1 + $0x8] sm:$0xff]
    %v25 = vld [vmem:[%s1 + $0x10] sm:$0xff]
    %v26 = vld [vmem:[%s1 + $0x18] sm:$0xff]
    %v27 = vld [vmem:[%s2] sm:$0x1]
    %v29 = vperm.slane %v27, 0
    %vm31 = vcmask 261120
    %v33 = vsel %vm31, %v21, 0
    %v36 = vsel %vm31, %v22, 0
    %38 = vmatpush.msra.mxu0 0.0
    %39 = vmatpush.msra.mxu0 0.0
    %40 = vmatpush.msra.mxu0 0.0
    %41 = vmatpush.msra.mxu0 0.0
    %42 = vmatpush.msra.mxu0 0.0
    %43 = vmatpush.msra.mxu0 0.0
    %44 = vmatpush.msra.mxu0 0.0
    %45 = vmatpush.msra.mxu0 0.0
    %46 = vmatpush.msra.mxu0 0.0
    %47 = vmatpush.msra.mxu0 0.0
    %48 = vmatpush.msra.mxu0 0.0
    %49 = vmatpush.msra.mxu0 0.0
    %50 = vmatpush.msra.mxu0 %v26
    %51 = vmatpush.msra.mxu0 %v25
    %52 = vmatpush.msra.mxu0 %v24
    %53 = vmatpush.msra.mxu0 %v23
    %54 = vmatmul.f32.gmra.mxu0 %v33
    %v55 = vpop.f32.mrf.mxu0
    %v56 = vadd.f32 %v29, %v55
    %57 = vmatmul.f32.gmra.mxu0 %v36
    %v58 = vpop.f32.mrf.mxu0
    %v59 = vadd.f32 %v29, %v58
    %60 = vdwg.mxu0
    %v61 = vmul.f32 %v56, 0.5
    %v62 = vmul.f32 %v59, 0.5
    %v63 = vmul.f32 %v56, 0.044715
    %v64 = vmul.f32 %v59, 0.044715
    %v65 = vmul.f32 %v63, %v56
    %v66 = vmul.f32 %v64, %v59
    %v67 = vmul.f32 %v65, %v56
    %v68 = vmul.f32 %v66, %v59
    %v69 = vadd.f32 %v56, %v67
    %v70 = vadd.f32 %v59, %v68
    %v71 = vmul.f32 %v69, 0.7978846
    %v72 = vmul.f32 %v70, 0.7978846
    %v73 = vtanh.pop %v71
    %v74 = vtanh.pop %v72
    %v75 = vadd.f32 %v73, 1.0
    %v76 = vadd.f32 %v74, 1.0
    %v77 = vmul.f32 %v61, %v75
    %v78 = vmul.f32 %v62, %v76
    %v79 = vld [vmem:[%s3] sm:$0xff]
    %v80 = vld [vmem:[%s3 + $0x8] sm:$0xff]
    %v81 = vld [vmem:[%s3 + $0x10] sm:$0xff]
    %v82 = vld [vmem:[%s3 + $0x18] sm:$0xff]
    %v83 = vld [vmem:[%s3 + $0x20] sm:$0xff]
    %v84 = vld [vmem:[%s3 + $0x28] sm:$0xff]
    %v85 = vld [vmem:[%s3 + $0x30] sm:$0xff]
    %v86 = vld [vmem:[%s3 + $0x38] sm:$0xff]
    %v87 = vld [vmem:[%s3 + $0x40] sm:$0xff]
    %v88 = vld [vmem:[%s3 + $0x48] sm:$0xff]
    %v89 = vld [vmem:[%s3 + $0x50] sm:$0xff]
    %v90 = vld [vmem:[%s3 + $0x58] sm:$0xff]
    %v91 = vld [vmem:[%s3 + $0x60] sm:$0xff]
    %v92 = vld [vmem:[%s3 + $0x68] sm:$0xff]
    %v93 = vld [vmem:[%s3 + $0x70] sm:$0xff]
    %v94 = vld [vmem:[%s3 + $0x78] sm:$0xff]
    %v95 = vld [vmem:[%s4] sm:$0x1]
    %v97 = vperm.slane %v95, 0
    %99 = vmatpush.msra.mxu0 %v94
    %100 = vmatpush.msra.mxu0 %v93
    %101 = vmatpush.msra.mxu0 %v92
    %102 = vmatpush.msra.mxu0 %v91
    %103 = vmatpush.msra.mxu0 %v90
    %104 = vmatpush.msra.mxu0 %v89
    %105 = vmatpush.msra.mxu0 %v88
    %106 = vmatpush.msra.mxu0 %v87
    %107 = vmatpush.msra.mxu0 %v86
    %108 = vmatpush.msra.mxu0 %v85
    %109 = vmatpush.msra.mxu0 %v84
    %110 = vmatpush.msra.mxu0 %v83
    %111 = vmatpush.msra.mxu0 %v82
    %112 = vmatpush.msra.mxu0 %v81
    %113 = vmatpush.msra.mxu0 %v80
    %114 = vmatpush.msra.mxu0 %v79
    %115 = vmatmul.f32.gmra.mxu0 %v77
    %v116 = vpop.f32.mrf.mxu0
    %v117 = vadd.f32 %v97, %v116
    %118 = vmatmul.f32.gmra.mxu0 %v78
    %v119 = vpop.f32.mrf.mxu0
    %v120 = vadd.f32 %v97, %v119
    %121 = vdwg.mxu0
    %122 = vst.msk [vmem:[#allocation2] sm:$0xff] %vm31, %v117
    %123 = vst.msk [vmem:[#allocation2 + $0x8] sm:$0xff] %vm31, %v120
    // Predicated region
    $region22: #{mlp_forward.1} parent=1 // pred_check
      _
    $region23: #{mlp_forward.1} parent=1 // pred_check_branch
      %125 = sbr.rel (0) target = $region25
    $region24: #{mlp_forward.1} parent=1 // pred_region
      %127 = vsyncadd [#allocation3], 0
      %s128 = sshll.u32 [#allocation2], 4
      %s129 = int_to_ptr.vmem [resolvable:$true] %s128
      %s130 = sshll.u32 %s5, 4
      %s131 = int_to_ptr.hbm [resolvable:$true] %s130
      %136 = dma.vmem_to_hbm [thread:$0]  %s129, 256, %s131, [#allocation3], 128, 128, 8
    $region25: #{mlp_forward.1} parent=1 // pred_fallthru
      _
    // Predicated region
    $region26: #{mlp_forward.1} parent=1 // pred_check
      _
    $region27: #{mlp_forward.1} parent=1 // pred_check_branch
      %138 = sbr.rel (0) target = $region29
    $region28: #{mlp_forward.1} parent=1 // pred_region
      %140 = dma.done [#allocation3], 256
    $region29: #{mlp_forward.1} parent=1 // pred_fallthru
      _
    %141 = vsyncpa [#allocation3], 1

</llo_original>
